<compile_context>
chip_gen: v7x
topology: tpu7x:2x2x1
jax: 0.10.0
libtpu: 0.0.40
codegen_flags: <defaults>
</compile_context>

<pallas_src>
import functools

import jax
import jax.numpy as jnp
import numpy as np
from jax.experimental import pallas as pl
from jax.experimental.pallas import tpu as pltpu

BN_EPS = 1e-5


# ----------------------------------------------------------------------------
# Pallas kernel: fused (TCS conv as one GEMM) + BN + bias + (residual) + ReLU
# ----------------------------------------------------------------------------
def _subblock_kernel(x_ref, w_ref, b_ref, *rest, has_residual):
    # x_ref : (k*Cin, Wp) bf16   im2col-unfolded activations (batch*time in lanes)
    # w_ref : (Ct, k*Cin) bf16   folded depthwise*pointwise*BN weights (Ct = Cout tile)
    # b_ref : (Ct, 1)     f32    folded bias (depthwise bias + pointwise bias + BN)
    # res_ref (optional): (Ct, Wp) f32
    # o_ref : (Ct, Wp)    f32
    if has_residual:
        res_ref, o_ref = rest
    else:
        (o_ref,) = rest

    acc = jnp.dot(w_ref[...], x_ref[...],
                  preferred_element_type=jnp.float32)   # single MXU matmul, f32 acc
    y = acc + b_ref[...]
    if has_residual:
        y = y + res_ref[...]
    # ReLU; Dropout is identity in eval mode.
    o_ref[...] = jnp.maximum(y, 0.0).astype(o_ref.dtype)


# ----------------------------------------------------------------------------
# Wrapper: layout plumbing (padding / im2col unfold) + pallas_call
# ----------------------------------------------------------------------------
@jax.jit
def subblock_apply(x, params, residual=None):
    """x: (B, Cin, T) f32; residual: (B, Cout, T) or None -> (B, Cout, T) f32."""
    B, Cin, T = x.shape
    wk = params["wk"]            # (k, Cout, Cin) bf16
    bias = params["bias"]        # (Cout, 1) f32
    k, Cout, _ = wk.shape

    pad_l = (k - 1) // 2         # PyTorch 'same' padding (odd kernel: symmetric)
    pad_r = (k - 1) - pad_l
    KC = k * Cin
    W = B * T
    Wp = ((W + 127) // 128) * 128          # lane-dense width (multiple of 128)

    # im2col unfold: row (j*Cin + c), column (b*T + t) holds x_padded[b, c, t + j].
    xp = jnp.pad(x.astype(jnp.float32), ((0, 0), (0, 0), (pad_l, pad_r)))
    taps = jnp.stack([xp[:, :, j:j + T] for j in range(k)], axis=0)   # (k, B, Cin, T)
    xs = jnp.transpose(taps, (0, 2, 1, 3)).reshape(KC, W)             # (k*Cin, B*T)
    xs = jnp.pad(xs, ((0, 0), (0, Wp - W))).astype(jnp.bfloat16)

    # Folded weights as a single (Cout, k*Cin) MXU matrix, matching xs row order.
    w2d = jnp.transpose(wk, (1, 0, 2)).reshape(Cout, KC)              # bf16

    has_res = residual is not None
    if has_res:
        rp = jnp.transpose(residual.astype(jnp.float32), (1, 0, 2)).reshape(Cout, W)
        rp = jnp.pad(rp, ((0, 0), (0, Wp - W)))

    # Split Cout across (up to) 2 "parallel" grid steps so both v7x TensorCores
    # are used; a 2-step grid is negligible overhead on v5e/v6e.
    n_ct = 2 if (Cout >= 16 and (Cout // 2) % 8 == 0) else 1
    ct = Cout // n_ct

    in_specs = [
        pl.BlockSpec((KC, Wp), lambda i: (0, 0)),
        pl.BlockSpec((ct, KC), lambda i: (i, 0)),
        pl.BlockSpec((ct, 1), lambda i: (i, 0)),
    ]
    args = [xs, w2d, bias]
    if has_res:
        in_specs.append(pl.BlockSpec((ct, Wp), lambda i: (i, 0)))
        args.append(rp)

    kern = functools.partial(_subblock_kernel, has_residual=has_res)
    out = pl.pallas_call(
        kern,
        out_shape=jax.ShapeDtypeStruct((Cout, Wp), jnp.float32),
        grid=(n_ct,),
        in_specs=in_specs,
        out_specs=pl.BlockSpec((ct, Wp), lambda i: (i, 0)),
        compiler_params=pltpu.CompilerParams(dimension_semantics=("parallel",)),
    )(*args)

    # (Cout, Wp) -> (B, Cout, T): drop the lane padding.
    out = out[:, :W].reshape(Cout, B, T)
    return jnp.transpose(out, (1, 0, 2))


# ----------------------------------------------------------------------------
# Parameter construction (PyTorch-default init) + folding for the kernel
# ----------------------------------------------------------------------------
def init_subblock_params(key, in_channels, out_channels, kernel_size):
    kd_w, kd_b, kp_w, kp_b, kbn = jax.random.split(key, 5)
    # depthwise Conv1d(Cin, Cin, k, groups=Cin): weight (Cin, 1, k), fan_in = k
    bd = 1.0 / np.sqrt(kernel_size)
    dw_w = jax.random.uniform(kd_w, (in_channels, 1, kernel_size),
                              minval=-bd, maxval=bd, dtype=jnp.float32)
    dw_b = jax.random.uniform(kd_b, (in_channels,), minval=-bd, maxval=bd,
                              dtype=jnp.float32)
    # pointwise Conv1d(Cin, Cout, 1): weight (Cout, Cin, 1), fan_in = Cin
    bp = 1.0 / np.sqrt(in_channels)
    pw_w = jax.random.uniform(kp_w, (out_channels, in_channels, 1),
                              minval=-bp, maxval=bp, dtype=jnp.float32)
    pw_b = jax.random.uniform(kp_b, (out_channels,), minval=-bp, maxval=bp,
                              dtype=jnp.float32)
    # BatchNorm1d running stats (randomized so the BN fold is actually exercised)
    k1, k2, k3, k4 = jax.random.split(kbn, 4)
    gamma = 1.0 + 0.1 * jax.random.normal(k1, (out_channels,), dtype=jnp.float32)
    beta = 0.1 * jax.random.normal(k2, (out_channels,), dtype=jnp.float32)
    mean = 0.1 * jax.random.normal(k3, (out_channels,), dtype=jnp.float32)
    var = 1.0 + 0.1 * jnp.abs(jax.random.normal(k4, (out_channels,), dtype=jnp.float32))
    return dict(dw_w=dw_w, dw_b=dw_b, pw_w=pw_w, pw_b=pw_b,
                gamma=gamma, beta=beta, mean=mean, var=var)


def fold_subblock_params(p):
    """Fold depthwise + pointwise + eval-mode BN into per-tap MXU weights + bias."""
    scale = p["gamma"] / jnp.sqrt(p["var"] + BN_EPS)                  # (Cout,)
    pw_eff = p["pw_w"][:, :, 0] * scale[:, None]                      # (Cout, Cin)
    dw_t = jnp.transpose(p["dw_w"][:, 0, :])                          # (k, Cin)
    wk = pw_eff[None, :, :] * dw_t[:, None, :]                        # (k, Cout, Cin)
    bias = pw_eff @ p["dw_b"] + scale * (p["pw_b"] - p["mean"]) + p["beta"]
    return {"wk": wk.astype(jnp.bfloat16),                            # MXU operands bf16
            "bias": bias.reshape(-1, 1).astype(jnp.float32)}          # elementwise f32


# ----------------------------------------------------------------------------
# Plain-JAX reference (exactly the PyTorch SubBlock forward, eval mode)
# ----------------------------------------------------------------------------
def subblock_ref(x, p, residual=None):
    B, Cin, T = x.shape
    k = p["dw_w"].shape[-1]
    pad_l = (k - 1) // 2
    pad_r = (k - 1) - pad_l
    xp = jnp.pad(x, ((0, 0), (0, 0), (pad_l, pad_r)))
    a = jnp.zeros((B, Cin, T), jnp.float32)
    for j in range(k):                              # depthwise cross-correlation
        a = a + p["dw_w"][:, 0, j][None, :, None] * xp[:, :, j:j + T]
    a = a + p["dw_b"][None, :, None]
    z = jnp.einsum("oc,bct->bot", p["pw_w"][:, :, 0], a) + p["pw_b"][None, :, None]
    s = p["gamma"] / jnp.sqrt(p["var"] + BN_EPS)
    y = s[None, :, None] * (z - p["mean"][None, :, None]) + p["beta"][None, :, None]
    if residual is not None:
        y = y + residual
    return jnp.maximum(y, 0.0)


# ----------------------------------------------------------------------------
if __name__ == "__main__":
    # MatchboxNet-style sub-block sizes (small): B=2, C=64->64, k=13, T=59
    B, Cin, Cout, K, T = 2, 64, 64, 13, 59

    key = jax.random.PRNGKey(0)
    kp, kx, kr = jax.random.split(key, 3)

    raw = init_subblock_params(kp, Cin, Cout, K)
    params = fold_subblock_params(raw)

    x = jax.random.normal(kx, (B, Cin, T), dtype=jnp.float32)
    residual = jax.random.normal(kr, (B, Cout, T), dtype=jnp.float32)

    y_res = jax.block_until_ready(subblock_apply(x, params, residual=residual))
    y_nores = jax.block_until_ready(subblock_apply(x, params))

    ref_res = subblock_ref(x, raw, residual=residual)
    ref_nores = subblock_ref(x, raw)

    assert y_res.shape == (B, Cout, T)
    assert bool(jnp.all(jnp.isfinite(y_res)))
    assert bool(jnp.all(jnp.isfinite(y_nores)))
    # bf16 MXU operands -> loose tolerance vs the f32 reference
    assert bool(jnp.allclose(y_res, ref_res, atol=5e-2, rtol=5e-2))
    assert bool(jnp.allclose(y_nores, ref_nores, atol=5e-2, rtol=5e-2))
    print("KERNEL_OK")
</pallas_src>

<mosaic_0001>
module attributes {stable_mosaic.version = 11 : i64} {
  func.func @_subblock_kernel(%arg0: i32, %arg1: memref<832x128xbf16, #tpu.memory_space<vmem>>, %arg2: memref<32x832xbf16, #tpu.memory_space<vmem>>, %arg3: memref<32x1xf32, #tpu.memory_space<vmem>>, %arg4: memref<32x128xf32, #tpu.memory_space<vmem>>, %arg5: memref<32x128xf32, #tpu.memory_space<vmem>>) attributes {dimension_semantics = [#tpu.dimension_semantics<parallel>], iteration_bounds = array<i64: 2>, scalar_prefetch = 0 : i64, scratch_operands = 0 : i64, tpu.core_type = #tpu.core_type<tc>, window_params = [{pipeline_mode = #tpu.pipeline_mode<synchronous>, transform_indices = @transform_0, window_bounds = array<i64: 832, 128>}, {transform_indices = @transform_1, window_bounds = array<i64: 32, 832>}, {transform_indices = @transform_2, window_bounds = array<i64: 32, 1>}, {transform_indices = @transform_3, window_bounds = array<i64: 32, 128>}, {transform_indices = @transform_4, window_bounds = array<i64: 32, 128>}]} {
    %c0 = arith.constant 0 : index
    %c0_0 = arith.constant 0 : index
    %0 = vector.load %arg2[%c0, %c0_0] : memref<32x832xbf16, #tpu.memory_space<vmem>>, vector<32x832xbf16>
    %c0_1 = arith.constant 0 : index
    %c0_2 = arith.constant 0 : index
    %1 = vector.load %arg1[%c0_1, %c0_2] : memref<832x128xbf16, #tpu.memory_space<vmem>>, vector<832x128xbf16>
    %cst = arith.constant dense<0.000000e+00> : vector<32x128xf32>
    %2 = tpu.matmul %0, %1, %cst {dimension_numbers = #tpu.dot_dimension_numbers<[1], [0], [0], [1], [0, 0, 1, 1], [], []>} : vector<32x832xbf16>, vector<832x128xbf16>, vector<32x128xf32> -> vector<32x128xf32>
    %c0_3 = arith.constant 0 : index
    %c0_4 = arith.constant 0 : index
    %3 = vector.load %arg3[%c0_3, %c0_4] : memref<32x1xf32, #tpu.memory_space<vmem>>, vector<32x1xf32>
    %4 = vector.broadcast %3 : vector<32x1xf32> to vector<32x128xf32>
    %5 = arith.addf %2, %4 : vector<32x128xf32>
    %c0_5 = arith.constant 0 : index
    %c0_6 = arith.constant 0 : index
    %6 = vector.load %arg4[%c0_5, %c0_6] : memref<32x128xf32, #tpu.memory_space<vmem>>, vector<32x128xf32>
    %7 = arith.addf %5, %6 : vector<32x128xf32>
    %cst_7 = arith.constant 0.000000e+00 : f32
    %8 = vector.broadcast %cst_7 : f32 to vector<32x128xf32>
    %9 = arith.maximumf %7, %8 : vector<32x128xf32>
    %c0_8 = arith.constant 0 : index
    %c0_9 = arith.constant 0 : index
    %10 = vector.load %arg5[%c0_8, %c0_9] : memref<32x128xf32, #tpu.memory_space<vmem>>, vector<32x128xf32>
    tpu.vector_store %arg5[%c0_8, %c0_9], %9 {strides = array<i32>} : memref<32x128xf32, #tpu.memory_space<vmem>>, vector<32x128xf32>,
    return
  }
  func.func @transform_0(%arg0: i32) -> (i32, i32) {
    %c0_i32 = arith.constant 0 : i32
    %c0_i32_0 = arith.constant 0 : i32
    %c0_i32_1 = arith.constant 0 : i32
    return %c0_i32, %c0_i32_0 : i32, i32
  }
  func.func @transform_1(%arg0: i32) -> (i32, i32) {
    %c0_i32 = arith.constant 0 : i32
    %c0_i32_0 = arith.constant 0 : i32
    return %arg0, %c0_i32 : i32, i32
  }
  func.func @transform_2(%arg0: i32) -> (i32, i32) {
    %c0_i32 = arith.constant 0 : i32
    %c0_i32_0 = arith.constant 0 : i32
    return %arg0, %c0_i32 : i32, i32
  }
  func.func @transform_3(%arg0: i32) -> (i32, i32) {
    %c0_i32 = arith.constant 0 : i32
    %c0_i32_0 = arith.constant 0 : i32
    return %arg0, %c0_i32 : i32, i32
  }
  func.func @transform_4(%arg0: i32) -> (i32, i32) {
    %c0_i32 = arith.constant 0 : i32
    %c0_i32_0 = arith.constant 0 : i32
    return %arg0, %c0_i32 : i32, i32
  }
}

</mosaic_0001>

<llo_original>
// kernel: subblock_apply.1
$region0: #{subblock_apply.1}
  #allocation0 [shape = 'u32[]', space=smem, size = 0x4, offset = 0x4, fixed_abs, tag = 'smem constant byte address 0x4 - core index']
  #allocation1 [shape = 'u32[144,128]{1,0:T(1,128)}', space=vmem, size = 0x12000, scoped, tag = 'internal scratch']
  %s0 = inlined_call_operand.vmem [shape: bf16[832,128], index: 0, kind: input, shape index: {}]
  %s1 = inlined_call_operand.vmem [shape: bf16[64,832], index: 1, kind: input, shape index: {}]
  %s2 = inlined_call_operand.vmem [shape: f32[64,1], index: 2, kind: input, shape index: {}]
  %s3 = inlined_call_operand.vmem [shape: f32[64,128], index: 3, kind: input, shape index: {}]
  %s4 = inlined_call_operand.vmem [shape: f32[64,128], index: 4, kind: output, shape index: {}]
  %s5 = sld [smem:[#allocation0]]
  $region49: #{subblock_apply.1} parent=0
    _
  %s7 = ssub.s32 1, %s5
  %s8 = scalar_select 0, %s7, %s5
  loop: start=0, step=1, limit=4
  $region2: #{subblock_apply.1} parent=0 // loop_pre_header
    _
  $region3: #{subblock_apply.1} parent=0 // loop_header
    %s10 = sphi 0, %s14
    %p11 = scmp.ge.s32.totalorder %s10, 4
    %s18 = sphi 0, %s18
    %s20 = sphi 0, %s18
    %s21 = sphi 0, %s20
    %s35 = sphi 0, %s21
    %s41 = sphi 0, %s43
    %s44 = sphi 0, %s41
    %s45 = sphi 0, %s44
    %s61 = sphi 0, %s45
    %s67 = sphi 0, %s69
    %s70 = sphi 0, %s67
    %s71 = sphi 0, %s70
    %s87 = sphi 0, %s71
    %s93 = sphi 0, %s95
    %s96 = sphi 0, %s93
    %s97 = sphi 0, %s96
    %s113 = sphi 0, %s97
    %s119 = sphi 0, %s121
    %s122 = sphi 0, %s119
    %s123 = sphi 0, %s122
    %s139 = sphi 0, %s123
  $region4: #{subblock_apply.1} parent=0 // loop_header_branch
    %13 = sbr.rel (%p11) target = $region8
  $region5: #{subblock_apply.1} parent=0 // loop_body
    %s15 = ssub.s32 %s10, 1
    %s16 = ssub.s32 %s10, 2
    %s17 = sadd.s32 %s10, 1
    %s19 = sadd.s32 %s18, 1
    %p22 = scmp.eq.s32.totalorder %s10, 1
    %p23 = scmp.ne.s32.totalorder %s18, %s20
    %p24 = scmp.eq.s32.totalorder %s10, 0
    %p25 = por %p23, %p24
    %p26 = scmp.ne.s32.totalorder %s18, %s20
    %p27 = scmp.eq.s32.totalorder %s15, 1
    %p28 = por %p26, %p27
    %p29 = scmp.ne.s32.totalorder %s20, %s21
    %p30 = scmp.eq.s32.totalorder %s15, 0
    %p31 = por %p29, %p30
    %p32 = scmp.ne.s32.totalorder %s20, %s21
    %p33 = scmp.eq.s32.totalorder %s16, 1
    %p34 = por %p32, %p33
    %p36 = scmp.ne.s32.totalorder %s21, %s35
    %p37 = scmp.eq.s32.totalorder %s16, 0
    %p38 = por %p36, %p37
    %s39 = ssub.s32 %s10, %s17
    %p40 = scmp.eq.s32.totalorder %s39, 0
    %s42 = sadd.s32 %s41, 1
    %s43 = scalar_select %p40, %s41, %s42
    %p46 = pneg %p40
    %p47 = scmp.eq.s32.totalorder %s10, 1
    %p48 = por %p46, %p47
    %p49 = scmp.ne.s32.totalorder %s41, %s44
    %p50 = scmp.eq.s32.totalorder %s10, 0
    %p51 = por %p49, %p50
    %p52 = scmp.ne.s32.totalorder %s41, %s44
    %p53 = scmp.eq.s32.totalorder %s15, 1
    %p54 = por %p52, %p53
    %p55 = scmp.ne.s32.totalorder %s44, %s45
    %p56 = scmp.eq.s32.totalorder %s15, 0
    %p57 = por %p55, %p56
    %p58 = scmp.ne.s32.totalorder %s44, %s45
    %p59 = scmp.eq.s32.totalorder %s16, 1
    %p60 = por %p58, %p59
    %p62 = scmp.ne.s32.totalorder %s45, %s61
    %p63 = scmp.eq.s32.totalorder %s16, 0
    %p64 = por %p62, %p63
    %s65 = ssub.s32 %s10, %s17
    %p66 = scmp.eq.s32.totalorder %s65, 0
    %s68 = sadd.s32 %s67, 1
    %s69 = scalar_select %p66, %s67, %s68
    %p72 = pneg %p66
    %p73 = scmp.eq.s32.totalorder %s10, 1
    %p74 = por %p72, %p73
    %p75 = scmp.ne.s32.totalorder %s67, %s70
    %p76 = scmp.eq.s32.totalorder %s10, 0
    %p77 = por %p75, %p76
    %p78 = scmp.ne.s32.totalorder %s67, %s70
    %p79 = scmp.eq.s32.totalorder %s15, 1
    %p80 = por %p78, %p79
    %p81 = scmp.ne.s32.totalorder %s70, %s71
    %p82 = scmp.eq.s32.totalorder %s15, 0
    %p83 = por %p81, %p82
    %p84 = scmp.ne.s32.totalorder %s70, %s71
    %p85 = scmp.eq.s32.totalorder %s16, 1
    %p86 = por %p84, %p85
    %p88 = scmp.ne.s32.totalorder %s71, %s87
    %p89 = scmp.eq.s32.totalorder %s16, 0
    %p90 = por %p88, %p89
    %s91 = ssub.s32 %s10, %s17
    %p92 = scmp.eq.s32.totalorder %s91, 0
    %s94 = sadd.s32 %s93, 1
    %s95 = scalar_select %p92, %s93, %s94
    %p98 = pneg %p92
    %p99 = scmp.eq.s32.totalorder %s10, 1
    %p100 = por %p98, %p99
    %p101 = scmp.ne.s32.totalorder %s93, %s96
    %p102 = scmp.eq.s32.totalorder %s10, 0
    %p103 = por %p101, %p102
    %p104 = scmp.ne.s32.totalorder %s93, %s96
    %p105 = scmp.eq.s32.totalorder %s15, 1
    %p106 = por %p104, %p105
    %p107 = scmp.ne.s32.totalorder %s96, %s97
    %p108 = scmp.eq.s32.totalorder %s15, 0
    %p109 = por %p107, %p108
    %p110 = scmp.ne.s32.totalorder %s96, %s97
    %p111 = scmp.eq.s32.totalorder %s16, 1
    %p112 = por %p110, %p111
    %p114 = scmp.ne.s32.totalorder %s97, %s113
    %p115 = scmp.eq.s32.totalorder %s16, 0
    %p116 = por %p114, %p115
    %s117 = ssub.s32 %s10, %s17
    %p118 = scmp.eq.s32.totalorder %s117, 0
    %s120 = sadd.s32 %s119, 1
    %s121 = scalar_select %p118, %s119, %s120
    %p124 = pneg %p118
    %p125 = scmp.eq.s32.totalorder %s10, 1
    %p126 = por %p124, %p125
    %p127 = scmp.ne.s32.totalorder %s119, %s122
    %p128 = scmp.eq.s32.totalorder %s10, 0
    %p129 = por %p127, %p128
    %p130 = scmp.ne.s32.totalorder %s119, %s122
    %p131 = scmp.eq.s32.totalorder %s15, 1
    %p132 = por %p130, %p131
    %p133 = scmp.ne.s32.totalorder %s122, %s123
    %p134 = scmp.eq.s32.totalorder %s15, 0
    %p135 = por %p133, %p134
    %p136 = scmp.ne.s32.totalorder %s122, %s123
    %p137 = scmp.eq.s32.totalorder %s16, 1
    %p138 = por %p136, %p137
    %p140 = scmp.ne.s32.totalorder %s123, %s139
    %p141 = scmp.eq.s32.totalorder %s16, 0
    %p142 = por %p140, %p141
    %p143 = scmp.le.s32.totalorder 1, %s10
    %p144 = scmp.lt.s32.totalorder %s10, 3
    %p145 = pnand %p143, %p144
    %p146 = pneg %p145
    // Predicated region
    $region9: #{subblock_apply.1} parent=5 // pred_check
      _
    $region10: #{subblock_apply.1} parent=5 // pred_check_branch
      %148 = sbr.rel (%p145) target = $region12
    $region11: #{subblock_apply.1} parent=5 // pred_region
      %s149 = ssub.s32 %s10, 1
      // Predicated region
      $region13: #{subblock_apply.1} parent=11 // pred_check
        %p150 = pneg %p31
      $region14: #{subblock_apply.1} parent=11 // pred_check_branch
        %152 = sbr.rel (%p150) target = $region16
      $region15: #{subblock_apply.1} parent=11 // pred_region
        _
      $region16: #{subblock_apply.1} parent=11 // pred_fallthru
        _
    $region12: #{subblock_apply.1} parent=5 // pred_fallthru
      _
    %p153 = scmp.lt.s32.totalorder %s10, 2
    // Predicated region
    $region17: #{subblock_apply.1} parent=5 // pred_check
      %p154 = pneg %p153
    $region18: #{subblock_apply.1} parent=5 // pred_check_branch
      %156 = sbr.rel (%p154) target = $region20
    $region19: #{subblock_apply.1} parent=5 // pred_region
      // Predicated region
      $region21: #{subblock_apply.1} parent=19 // pred_check
        %p157 = pneg %p51
      $region22: #{subblock_apply.1} parent=19 // pred_check_branch
        %159 = sbr.rel (%p157) target = $region24
      $region23: #{subblock_apply.1} parent=19 // pred_region
        %s160 = smul.u32 4, %s10
        %p161 = scmp.lt.s32.totalorder %s160, 7
        %s162 = scalar_select %p161, %s160, 7
        %s163 = smul.addr %s162, 7
        %s164 = smul.addr %s163, 4
        %s165 = scalar_lea.vmem %s1, %s164
        %s166 = smul.u32 4, %s10
      $region24: #{subblock_apply.1} parent=19 // pred_fallthru
        _
      // Predicated region
      $region25: #{subblock_apply.1} parent=19 // pred_check
        %p167 = pneg %p77
      $region26: #{subblock_apply.1} parent=19 // pred_check_branch
        %169 = sbr.rel (%p167) target = $region28
      $region27: #{subblock_apply.1} parent=19 // pred_region
        %s170 = smul.u32 4, %s10
        %p171 = scmp.lt.s32.totalorder %s170, 7
        %s172 = scalar_select %p171, %s170, 7
        %s173 = smul.addr %s172, 8
        %s174 = scalar_lea.vmem %s2, %s173
        %s175 = smul.u32 4, %s10
      $region28: #{subblock_apply.1} parent=19 // pred_fallthru
        _
      // Predicated region
      $region29: #{subblock_apply.1} parent=19 // pred_check
        %p176 = pneg %p103
      $region30: #{subblock_apply.1} parent=19 // pred_check_branch
        %178 = sbr.rel (%p176) target = $region32
      $region31: #{subblock_apply.1} parent=19 // pred_region
        %s179 = smul.u32 4, %s10
        %p180 = scmp.lt.s32.totalorder %s179, 7
        %s181 = scalar_select %p180, %s179, 7
        %s182 = smul.addr %s181, 8
        %s183 = scalar_lea.vmem %s3, %s182
        %s184 = smul.u32 4, %s10
      $region32: #{subblock_apply.1} parent=19 // pred_fallthru
        _
    $region20: #{subblock_apply.1} parent=5 // pred_fallthru
      _
    %p185 = scmp.le.s32.totalorder 1, %s10
    %p186 = scmp.lt.s32.totalorder %s10, 3
    %p187 = pnand %p185, %p186
    %p188 = pneg %p187
    // Predicated region
    $region33: #{subblock_apply.1} parent=5 // pred_check
      _
    $region34: #{subblock_apply.1} parent=5 // pred_check_branch
      %190 = sbr.rel (%p187) target = $region36
    $region35: #{subblock_apply.1} parent=5 // pred_region
      %s191 = ssub.s32 %s10, 1
      %p192 = pneg %p31
      %p193 = pneg %p28
      %s194 = smul.u32 4, %s15
      %p195 = scmp.lt.s32.totalorder %s194, 7
      %s196 = scalar_select %p195, %s194, 7
      %s197 = smul.addr %s196, 7
      %s198 = smul.addr %s197, 4
      %s199 = scalar_lea.vmem %s1, %s198
      %p200 = pneg %p57
      %p201 = pneg %p54
      %s202 = smul.u32 4, %s15
      %p203 = scmp.lt.s32.totalorder %s202, 7
      %s204 = scalar_select %p203, %s202, 7
      %s205 = smul.addr %s204, 8
      %s206 = scalar_lea.vmem %s2, %s205
      %p207 = pneg %p83
      %p208 = pneg %p80
      %s209 = smul.u32 4, %s15
      %p210 = scmp.lt.s32.totalorder %s209, 7
      %s211 = scalar_select %p210, %s209, 7
      %s212 = smul.addr %s211, 8
      %s213 = scalar_lea.vmem %s3, %s212
      %p214 = pneg %p109
      %p215 = pneg %p106
      %p216 = pneg %p135
      %p217 = pneg %p132
      %s218 = smul.u32 4, %s15
      %p219 = scmp.lt.s32.totalorder %s218, 7
      %s220 = scalar_select %p219, %s218, 7
      %s221 = smul.addr %s220, 8
      %s222 = scalar_lea.vmem %s4, %s221
      %s223 = smul.u32 4, %s15
      %p224 = scmp.lt.s32.totalorder %s223, 7
      %s225 = scalar_select %p224, %s223, 7
      %s226 = smul.addr %s225, 7
      %s227 = smul.addr %s226, 4
      %s228 = scalar_lea.vmem %s1, %s227
      %s229 = smul.u32 4, %s15
      %s230 = smul.u32 4, %s15
      %p231 = scmp.lt.s32.totalorder %s230, 7
      %s232 = scalar_select %p231, %s230, 7
      %s233 = smul.addr %s232, 8
      %s234 = scalar_lea.vmem %s2, %s233
      %s235 = smul.u32 4, %s15
      %s236 = smul.u32 4, %s15
      %p237 = scmp.lt.s32.totalorder %s236, 7
      %s238 = scalar_select %p237, %s236, 7
      %s239 = smul.addr %s238, 8
      %s240 = scalar_lea.vmem %s3, %s239
      %s241 = smul.u32 4, %s15
      %s242 = smul.u32 4, %s15
      %p243 = scmp.lt.s32.totalorder %s242, 7
      %s244 = scalar_select %p243, %s242, 7
      %s245 = smul.addr %s244, 8
      %s246 = scalar_lea.vmem %s4, %s245
      %s247 = smul.u32 4, %s15
      %v249 = vld [vmem:[%s228] sm:$0xff]
      %v250 = vld [vmem:[%s228 + $0x8] sm:$0xff]
      %v251 = vld [vmem:[%s228 + $0x10] sm:$0xff]
      %v252 = vld [vmem:[%s228 + $0x18] sm:$0xf]
      %v253 = vld [vmem:[%s228 + $0x1c] sm:$0xff]
      %v254 = vld [vmem:[%s228 + $0x24] sm:$0xff]
      %v255 = vld [vmem:[%s228 + $0x2c] sm:$0xff]
      %v256 = vld [vmem:[%s228 + $0x34] sm:$0xf]
      %v257 = vld [vmem:[%s228 + $0x38] sm:$0xff]
      %v258 = vld [vmem:[%s228 + $0x40] sm:$0xff]
      %v259 = vld [vmem:[%s228 + $0x48] sm:$0xff]
      %v260 = vld [vmem:[%s228 + $0x50] sm:$0xf]
      %v261 = vld [vmem:[%s228 + $0x54] sm:$0xff]
      %v262 = vld [vmem:[%s228 + $0x5c] sm:$0xff]
      %v263 = vld [vmem:[%s228 + $0x64] sm:$0xff]
      %v264 = vld [vmem:[%s228 + $0x6c] sm:$0xf]
      %v265 = vld [vmem:[%s0] sm:$0xf]
      %v266 = vld [vmem:[%s0 + $0x4] sm:$0xf]
      %v267 = vld [vmem:[%s0 + $0x8] sm:$0xf]
      %v268 = vld [vmem:[%s0 + $0xc] sm:$0xf]
      %v269 = vld [vmem:[%s0 + $0x10] sm:$0xf]
      %v270 = vld [vmem:[%s0 + $0x14] sm:$0xf]
      %v271 = vld [vmem:[%s0 + $0x18] sm:$0xf]
      %v272 = vld [vmem:[%s0 + $0x1c] sm:$0xf]
      %v273 = vld [vmem:[%s0 + $0x20] sm:$0xf]
      %v274 = vld [vmem:[%s0 + $0x24] sm:$0xf]
      %v275 = vld [vmem:[%s0 + $0x28] sm:$0xf]
      %v276 = vld [vmem:[%s0 + $0x2c] sm:$0xf]
      %v277 = vld [vmem:[%s0 + $0x30] sm:$0xf]
      %v278 = vld [vmem:[%s0 + $0x34] sm:$0xf]
      %v279 = vld [vmem:[%s0 + $0x38] sm:$0xf]
      %v280 = vld [vmem:[%s0 + $0x3c] sm:$0xf]
      %v281 = vld [vmem:[%s0 + $0x40] sm:$0xf]
      %v282 = vld [vmem:[%s0 + $0x44] sm:$0xf]
      %v283 = vld [vmem:[%s0 + $0x48] sm:$0xf]
      %v284 = vld [vmem:[%s0 + $0x4c] sm:$0xf]
      %v285 = vld [vmem:[%s0 + $0x50] sm:$0xf]
      %v286 = vld [vmem:[%s0 + $0x54] sm:$0xf]
      %v287 = vld [vmem:[%s0 + $0x58] sm:$0xf]
      %v288 = vld [vmem:[%s0 + $0x5c] sm:$0xf]
      %v289 = vld [vmem:[%s0 + $0x60] sm:$0xf]
      %v290 = vld [vmem:[%s0 + $0x64] sm:$0xf]
      %v291 = vld [vmem:[%s0 + $0x68] sm:$0xf]
      %v292 = vld [vmem:[%s0 + $0x6c] sm:$0xf]
      %v293 = vld [vmem:[%s0 + $0x70] sm:$0xf]
      %v294 = vld [vmem:[%s0 + $0x74] sm:$0xf]
      %v295 = vld [vmem:[%s0 + $0x78] sm:$0xf]
      %v296 = vld [vmem:[%s0 + $0x7c] sm:$0xf]
      %v297 = vld [vmem:[%s0 + $0x80] sm:$0xf]
      %v298 = vld [vmem:[%s0 + $0x84] sm:$0xf]
      %v299 = vld [vmem:[%s0 + $0x88] sm:$0xf]
      %v300 = vld [vmem:[%s0 + $0x8c] sm:$0xf]
      %v301 = vld [vmem:[%s0 + $0x90] sm:$0xf]
      %v302 = vld [vmem:[%s0 + $0x94] sm:$0xf]
      %v303 = vld [vmem:[%s0 + $0x98] sm:$0xf]
      %v304 = vld [vmem:[%s0 + $0x9c] sm:$0xf]
      %v305 = vld [vmem:[%s0 + $0xa0] sm:$0xf]
      %v306 = vld [vmem:[%s0 + $0xa4] sm:$0xf]
      %v307 = vld [vmem:[%s0 + $0xa8] sm:$0xf]
      %v308 = vld [vmem:[%s0 + $0xac] sm:$0xf]
      %v309 = vld [vmem:[%s0 + $0xb0] sm:$0xf]
      %v310 = vld [vmem:[%s0 + $0xb4] sm:$0xf]
      %v311 = vld [vmem:[%s0 + $0xb8] sm:$0xf]
      %v312 = vld [vmem:[%s0 + $0xbc] sm:$0xf]
      %v313 = vld [vmem:[%s0 + $0xc0] sm:$0xf]
      %v314 = vld [vmem:[%s0 + $0xc4] sm:$0xf]
      %v315 = vld [vmem:[%s0 + $0xc8] sm:$0xf]
      %v316 = vld [vmem:[%s0 + $0xcc] sm:$0xf]
      %v317 = vld [vmem:[%s0 + $0xd0] sm:$0xf]
      %v318 = vld [vmem:[%s0 + $0xd4] sm:$0xf]
      %v319 = vld [vmem:[%s0 + $0xd8] sm:$0xf]
      %v320 = vld [vmem:[%s0 + $0xdc] sm:$0xf]
      %v321 = vld [vmem:[%s0 + $0xe0] sm:$0xf]
      %v322 = vld [vmem:[%s0 + $0xe4] sm:$0xf]
      %v323 = vld [vmem:[%s0 + $0xe8] sm:$0xf]
      %v324 = vld [vmem:[%s0 + $0xec] sm:$0xf]
      %v325 = vld [vmem:[%s0 + $0xf0] sm:$0xf]
      %v326 = vld [vmem:[%s0 + $0xf4] sm:$0xf]
      %v327 = vld [vmem:[%s0 + $0xf8] sm:$0xf]
      %v328 = vld [vmem:[%s0 + $0xfc] sm:$0xf]
      %v329 = vld [vmem:[%s0 + $0x100] sm:$0xf]
      %v330 = vld [vmem:[%s0 + $0x104] sm:$0xf]
      %v331 = vld [vmem:[%s0 + $0x108] sm:$0xf]
      %v332 = vld [vmem:[%s0 + $0x10c] sm:$0xf]
      %v333 = vld [vmem:[%s0 + $0x110] sm:$0xf]
      %v334 = vld [vmem:[%s0 + $0x114] sm:$0xf]
      %v335 = vld [vmem:[%s0 + $0x118] sm:$0xf]
      %v336 = vld [vmem:[%s0 + $0x11c] sm:$0xf]
      %v337 = vld [vmem:[%s0 + $0x120] sm:$0xf]
      %v338 = vld [vmem:[%s0 + $0x124] sm:$0xf]
      %v339 = vld [vmem:[%s0 + $0x128] sm:$0xf]
      %v340 = vld [vmem:[%s0 + $0x12c] sm:$0xf]
      %v341 = vld [vmem:[%s0 + $0x130] sm:$0xf]
      %v342 = vld [vmem:[%s0 + $0x134] sm:$0xf]
      %v343 = vld [vmem:[%s0 + $0x138] sm:$0xf]
      %v344 = vld [vmem:[%s0 + $0x13c] sm:$0xf]
      %v345 = vld [vmem:[%s0 + $0x140] sm:$0xf]
      %v346 = vld [vmem:[%s0 + $0x144] sm:$0xf]
      %v347 = vld [vmem:[%s0 + $0x148] sm:$0xf]
      %v348 = vld [vmem:[%s0 + $0x14c] sm:$0xf]
      %v349 = vld [vmem:[%s0 + $0x150] sm:$0xf]
      %v350 = vld [vmem:[%s0 + $0x154] sm:$0xf]
      %v351 = vld [vmem:[%s0 + $0x158] sm:$0xf]
      %v352 = vld [vmem:[%s0 + $0x15c] sm:$0xf]
      %v353 = vld [vmem:[%s0 + $0x160] sm:$0xf]
      %v354 = vld [vmem:[%s0 + $0x164] sm:$0xf]
      %v355 = vld [vmem:[%s0 + $0x168] sm:$0xf]
      %v356 = vld [vmem:[%s0 + $0x16c] sm:$0xf]
      %v357 = vld [vmem:[%s0 + $0x170] sm:$0xf]
      %v358 = vld [vmem:[%s0 + $0x174] sm:$0xf]
      %v359 = vld [vmem:[%s0 + $0x178] sm:$0xf]
      %v360 = vld [vmem:[%s0 + $0x17c] sm:$0xf]
      %v361 = vld [vmem:[%s0 + $0x180] sm:$0xf]
      %v362 = vld [vmem:[%s0 + $0x184] sm:$0xf]
      %v363 = vld [vmem:[%s0 + $0x188] sm:$0xf]
      %v364 = vld [vmem:[%s0 + $0x18c] sm:$0xf]
      %v365 = vld [vmem:[%s0 + $0x190] sm:$0xf]
      %v366 = vld [vmem:[%s0 + $0x194] sm:$0xf]
      %v367 = vld [vmem:[%s0 + $0x198] sm:$0xf]
      %v368 = vld [vmem:[%s0 + $0x19c] sm:$0xf]
      %v369 = vld [vmem:[%s234] sm:$0xff]
      %v370 = vld [vmem:[%s234 + $0x8] sm:$0xff]
      %v371 = vld [vmem:[%s234 + $0x10] sm:$0xff]
      %v372 = vld [vmem:[%s234 + $0x18] sm:$0xff]
      %374 = vset.pattern.permute.xlu0 0
      %375 = vperm.xlu0 %374, %v369
      %v376 = vpop.permute.xlu0 %375
      %379 = vset.pattern.permute.xlu0 0
      %380 = vperm.xlu0 %379, %v370
      %v381 = vpop.permute.xlu0 %380
      %384 = vset.pattern.permute.xlu0 0
      %385 = vperm.xlu0 %384, %v371
      %v386 = vpop.permute.xlu0 %385
      %389 = vset.pattern.permute.xlu0 0
      %390 = vperm.xlu0 %389, %v372
      %v391 = vpop.permute.xlu0 %390
      %v409 = vunpack.c.l.b16 %v249
      %v410 = vunpack.c.h.b16 %v249
      %v411 = vunpack.c.l.b16 %v250
      %v412 = vunpack.c.h.b16 %v250
      %v413 = vunpack.c.l.b16 %v251
      %v414 = vunpack.c.h.b16 %v251
      %v415 = vunpack.c.l.b16 %v252
      %v416 = vunpack.c.l.b16 %v253
      %v417 = vunpack.c.h.b16 %v253
      %v418 = vunpack.c.l.b16 %v254
      %v419 = vunpack.c.h.b16 %v254
      %v420 = vunpack.c.l.b16 %v255
      %v421 = vunpack.c.h.b16 %v255
      %v422 = vunpack.c.l.b16 %v256
      %v423 = vunpack.c.l.b16 %v257
      %v424 = vunpack.c.h.b16 %v257
      %v425 = vunpack.c.l.b16 %v258
      %v426 = vunpack.c.h.b16 %v258
      %v427 = vunpack.c.l.b16 %v259
      %v428 = vunpack.c.h.b16 %v259
      %v429 = vunpack.c.l.b16 %v260
      %v430 = vunpack.c.l.b16 %v261
      %v431 = vunpack.c.h.b16 %v261
      %v432 = vunpack.c.l.b16 %v262
      %v433 = vunpack.c.h.b16 %v262
      %v434 = vunpack.c.l.b16 %v263
      %v435 = vunpack.c.h.b16 %v263
      %v436 = vunpack.c.l.b16 %v264
      %v437 = vpack.c.b16 %v416, %v409
      %v438 = vpack.c.b16 %v417, %v410
      %v439 = vpack.c.b16 %v418, %v411
      %v440 = vpack.c.b16 %v419, %v412
      %v441 = vpack.c.b16 %v420, %v413
      %v442 = vpack.c.b16 %v421, %v414
      %v443 = vpack.c.b16 %v422, %v415
      %v444 = vpack.c.b16 %v430, %v423
      %v445 = vpack.c.b16 %v431, %v424
      %v446 = vpack.c.b16 %v432, %v425
      %v447 = vpack.c.b16 %v433, %v426
      %v448 = vpack.c.b16 %v434, %v427
      %v449 = vpack.c.b16 %v435, %v428
      %v450 = vpack.c.b16 %v436, %v429
      %v567 = vunpack.c.l.b16 %v265
      %v568 = vunpack.c.l.b16 %v266
      %v569 = vunpack.c.l.b16 %v267
      %v570 = vunpack.c.l.b16 %v268
      %v571 = vunpack.c.l.b16 %v269
      %v572 = vunpack.c.l.b16 %v270
      %v573 = vunpack.c.l.b16 %v271
      %v574 = vunpack.c.l.b16 %v272
      %v575 = vunpack.c.l.b16 %v273
      %v576 = vunpack.c.l.b16 %v274
      %v577 = vunpack.c.l.b16 %v275
      %v578 = vunpack.c.l.b16 %v276
      %v579 = vunpack.c.l.b16 %v277
      %v580 = vunpack.c.l.b16 %v278
      %v581 = vunpack.c.l.b16 %v279
      %v582 = vunpack.c.l.b16 %v280
      %v583 = vunpack.c.l.b16 %v281
      %v584 = vunpack.c.l.b16 %v282
      %v585 = vunpack.c.l.b16 %v283
      %v586 = vunpack.c.l.b16 %v284
      %v587 = vunpack.c.l.b16 %v285
      %v588 = vunpack.c.l.b16 %v286
      %v589 = vunpack.c.l.b16 %v287
      %v590 = vunpack.c.l.b16 %v288
      %v591 = vunpack.c.l.b16 %v289
      %v592 = vunpack.c.l.b16 %v290
      %v593 = vunpack.c.l.b16 %v291
      %v594 = vunpack.c.l.b16 %v292
      %v595 = vunpack.c.l.b16 %v293
      %v596 = vunpack.c.l.b16 %v294
      %v597 = vunpack.c.l.b16 %v295
      %v598 = vunpack.c.l.b16 %v296
      %v599 = vunpack.c.l.b16 %v297
      %v600 = vunpack.c.l.b16 %v298
      %v601 = vunpack.c.l.b16 %v299
      %v602 = vunpack.c.l.b16 %v300
      %v603 = vunpack.c.l.b16 %v301
      %v604 = vunpack.c.l.b16 %v302
      %v605 = vunpack.c.l.b16 %v303
      %v606 = vunpack.c.l.b16 %v304
      %v607 = vunpack.c.l.b16 %v305
      %v608 = vunpack.c.l.b16 %v306
      %v609 = vunpack.c.l.b16 %v307
      %v610 = vunpack.c.l.b16 %v308
      %v611 = vunpack.c.l.b16 %v309
      %v612 = vunpack.c.l.b16 %v310
      %v613 = vunpack.c.l.b16 %v311
      %v614 = vunpack.c.l.b16 %v312
      %v615 = vunpack.c.l.b16 %v313
      %v616 = vunpack.c.l.b16 %v314
      %v617 = vunpack.c.l.b16 %v315
      %v618 = vunpack.c.l.b16 %v316
      %v619 = vunpack.c.l.b16 %v317
      %v620 = vunpack.c.l.b16 %v318
      %v621 = vunpack.c.l.b16 %v319
      %v622 = vunpack.c.l.b16 %v320
      %v623 = vunpack.c.l.b16 %v321
      %v624 = vunpack.c.l.b16 %v322
      %v625 = vunpack.c.l.b16 %v323
      %v626 = vunpack.c.l.b16 %v324
      %v627 = vunpack.c.l.b16 %v325
      %v628 = vunpack.c.l.b16 %v326
      %v629 = vunpack.c.l.b16 %v327
      %v630 = vunpack.c.l.b16 %v328
      %v631 = vunpack.c.l.b16 %v329
      %v632 = vunpack.c.l.b16 %v330
      %v633 = vunpack.c.l.b16 %v331
      %v634 = vunpack.c.l.b16 %v332
      %v635 = vunpack.c.l.b16 %v333
      %v636 = vunpack.c.l.b16 %v334
      %v637 = vunpack.c.l.b16 %v335
      %v638 = vunpack.c.l.b16 %v336
      %v639 = vunpack.c.l.b16 %v337
      %v640 = vunpack.c.l.b16 %v338
      %v641 = vunpack.c.l.b16 %v339
      %v642 = vunpack.c.l.b16 %v340
      %v643 = vunpack.c.l.b16 %v341
      %v644 = vunpack.c.l.b16 %v342
      %v645 = vunpack.c.l.b16 %v343
      %v646 = vunpack.c.l.b16 %v344
      %v647 = vunpack.c.l.b16 %v345
      %v648 = vunpack.c.l.b16 %v346
      %v649 = vunpack.c.l.b16 %v347
      %v650 = vunpack.c.l.b16 %v348
      %v651 = vunpack.c.l.b16 %v349
      %v652 = vunpack.c.l.b16 %v350
      %v653 = vunpack.c.l.b16 %v351
      %v654 = vunpack.c.l.b16 %v352
      %v655 = vunpack.c.l.b16 %v353
      %v656 = vunpack.c.l.b16 %v354
      %v657 = vunpack.c.l.b16 %v355
      %v658 = vunpack.c.l.b16 %v356
      %v659 = vunpack.c.l.b16 %v357
      %v660 = vunpack.c.l.b16 %v358
      %v661 = vunpack.c.l.b16 %v359
      %v662 = vunpack.c.l.b16 %v360
      %v663 = vunpack.c.l.b16 %v361
      %v664 = vunpack.c.l.b16 %v362
      %v665 = vunpack.c.l.b16 %v363
      %v666 = vunpack.c.l.b16 %v364
      %v667 = vunpack.c.l.b16 %v365
      %v668 = vunpack.c.l.b16 %v366
      %v669 = vunpack.c.l.b16 %v367
      %v670 = vunpack.c.l.b16 %v368
      %v671 = vpack.c.b16 %v568, %v567
      %v672 = vpack.c.b16 %v570, %v569
      %v673 = vpack.c.b16 %v572, %v571
      %v674 = vpack.c.b16 %v574, %v573
      %v675 = vpack.c.b16 %v576, %v575
      %v676 = vpack.c.b16 %v578, %v577
      %v677 = vpack.c.b16 %v580, %v579
      %v678 = vpack.c.b16 %v582, %v581
      %v679 = vpack.c.b16 %v584, %v583
      %v680 = vpack.c.b16 %v586, %v585
      %v681 = vpack.c.b16 %v588, %v587
      %v682 = vpack.c.b16 %v590, %v589
      %v683 = vpack.c.b16 %v592, %v591
      %v684 = vpack.c.b16 %v594, %v593
      %v685 = vpack.c.b16 %v596, %v595
      %v686 = vpack.c.b16 %v598, %v597
      %v687 = vpack.c.b16 %v600, %v599
      %v688 = vpack.c.b16 %v602, %v601
      %v689 = vpack.c.b16 %v604, %v603
      %v690 = vpack.c.b16 %v606, %v605
      %v691 = vpack.c.b16 %v608, %v607
      %v692 = vpack.c.b16 %v610, %v609
      %v693 = vpack.c.b16 %v612, %v611
      %v694 = vpack.c.b16 %v614, %v613
      %v695 = vpack.c.b16 %v616, %v615
      %v696 = vpack.c.b16 %v618, %v617
      %v697 = vpack.c.b16 %v620, %v619
      %v698 = vpack.c.b16 %v622, %v621
      %v699 = vpack.c.b16 %v624, %v623
      %v700 = vpack.c.b16 %v626, %v625
      %v701 = vpack.c.b16 %v628, %v627
      %v702 = vpack.c.b16 %v630, %v629
      %v703 = vpack.c.b16 %v632, %v631
      %v704 = vpack.c.b16 %v634, %v633
      %v705 = vpack.c.b16 %v636, %v635
      %v706 = vpack.c.b16 %v638, %v637
      %v707 = vpack.c.b16 %v640, %v639
      %v708 = vpack.c.b16 %v642, %v641
      %v709 = vpack.c.b16 %v644, %v643
      %v710 = vpack.c.b16 %v646, %v645
      %v711 = vpack.c.b16 %v648, %v647
      %v712 = vpack.c.b16 %v650, %v649
      %v713 = vpack.c.b16 %v652, %v651
      %v714 = vpack.c.b16 %v654, %v653
      %v715 = vpack.c.b16 %v656, %v655
      %v716 = vpack.c.b16 %v658, %v657
      %v717 = vpack.c.b16 %v660, %v659
      %v718 = vpack.c.b16 %v662, %v661
      %v719 = vpack.c.b16 %v664, %v663
      %v720 = vpack.c.b16 %v666, %v665
      %v721 = vpack.c.b16 %v668, %v667
      %v722 = vpack.c.b16 %v670, %v669
      %vm775 = vcmask 523264
      %v777 = vsel %vm775, %v443, 0
      %v780 = vsel %vm775, %v450, 0
      %782 = vmatprep.subr.bf16.mxu0 0
      %783 = vmatpush1.bf16.msra.mxu0 %v671
      %784 = vmatprep.subr.bf16.mxu0 0
      %785 = vmatpush1.bf16.msra.mxu0 %v672
      %786 = vmatprep.subr.bf16.mxu0 0
      %787 = vmatpush1.bf16.msra.mxu0 %v673
      %788 = vmatprep.subr.bf16.mxu0 0
      %789 = vmatpush1.bf16.msra.mxu0 %v674
      %790 = vmatprep.subr.bf16.mxu0 0
      %791 = vmatpush1.bf16.msra.mxu0 %v675
      %792 = vmatprep.subr.bf16.mxu0 0
      %793 = vmatpush1.bf16.msra.mxu0 %v676
      %794 = vmatprep.subr.bf16.mxu0 0
      %795 = vmatpush1.bf16.msra.mxu0 %v677
      %796 = vmatprep.subr.bf16.mxu0 0
      %797 = vmatpush1.bf16.msra.mxu0 %v678
      %798 = vmatprep.subr.bf16.mxu0 0
      %799 = vmatpush1.bf16.msra.mxu0 %v679
      %800 = vmatprep.subr.bf16.mxu0 0
      %801 = vmatpush1.bf16.msra.mxu0 %v680
      %802 = vmatprep.subr.bf16.mxu0 0
      %803 = vmatpush1.bf16.msra.mxu0 %v681
      %804 = vmatprep.subr.bf16.mxu0 0
      %805 = vmatpush1.bf16.msra.mxu0 %v682
      %806 = vmatprep.subr.bf16.mxu0 0
      %807 = vmatpush1.bf16.msra.mxu0 %v683
      %808 = vmatprep.subr.bf16.mxu0 0
      %809 = vmatpush1.bf16.msra.mxu0 %v684
      %810 = vmatprep.subr.bf16.mxu0 0
      %811 = vmatpush1.bf16.msra.mxu0 %v685
      %812 = vmatprep.subr.bf16.mxu0 0
      %813 = vmatpush1.bf16.msra.mxu0 %v686
      %814 = vmatprep.mubr.bf16.mxu0 %v438
      %815 = vmatmul.mubr.bf16.gmra.mrb[0].mxu0 %v437
      %v816 = vpop.f32.mrb[0].mxu0
      %v817 = vadd.f32 %v376, %v816
      %v818 = vpop.f32.mrb[0].mxu0
      %v819 = vpop.f32.mrb[0].mxu0
      %v820 = vadd.f32 %v381, %v819
      %v821 = vpop.f32.mrb[0].mxu0
      %822 = vmatprep.mubr.bf16.mxu0 %v445
      %823 = vmatmul.mubr.bf16.gmra.mrb[0].mxu0 %v444
      %v824 = vpop.f32.mrb[0].mxu0
      %v825 = vadd.f32 %v386, %v824
      %v826 = vpop.f32.mrb[0].mxu0
      %v827 = vpop.f32.mrb[0].mxu0
      %v828 = vadd.f32 %v391, %v827
      %v829 = vpop.f32.mrb[0].mxu0
      %830 = vdwg.mxu0
      %831 = vmatprep.subr.bf16.mxu0 0
      %832 = vmatpush1.bf16.msra.mxu0 %v687
      %833 = vmatprep.subr.bf16.mxu0 0
      %834 = vmatpush1.bf16.msra.mxu0 %v688
      %835 = vmatprep.subr.bf16.mxu0 0
      %836 = vmatpush1.bf16.msra.mxu0 %v689
      %837 = vmatprep.subr.bf16.mxu0 0
      %838 = vmatpush1.bf16.msra.mxu0 %v690
      %839 = vmatprep.subr.bf16.mxu0 0
      %840 = vmatpush1.bf16.msra.mxu0 %v691
      %841 = vmatprep.subr.bf16.mxu0 0
      %842 = vmatpush1.bf16.msra.mxu0 %v692
      %843 = vmatprep.subr.bf16.mxu0 0
      %844 = vmatpush1.bf16.msra.mxu0 %v693
      %845 = vmatprep.subr.bf16.mxu0 0
      %846 = vmatpush1.bf16.msra.mxu0 %v694
      %847 = vmatprep.subr.bf16.mxu0 0
      %848 = vmatpush1.bf16.msra.mxu0 %v695
      %849 = vmatprep.subr.bf16.mxu0 0
      %850 = vmatpush1.bf16.msra.mxu0 %v696
      %851 = vmatprep.subr.bf16.mxu0 0
      %852 = vmatpush1.bf16.msra.mxu0 %v697
      %853 = vmatprep.subr.bf16.mxu0 0
      %854 = vmatpush1.bf16.msra.mxu0 %v698
      %855 = vmatprep.subr.bf16.mxu0 0
      %856 = vmatpush1.bf16.msra.mxu0 %v699
      %857 = vmatprep.subr.bf16.mxu0 0
      %858 = vmatpush1.bf16.msra.mxu0 %v700
      %859 = vmatprep.subr.bf16.mxu0 0
      %860 = vmatpush1.bf16.msra.mxu0 %v701
      %861 = vmatprep.subr.bf16.mxu0 0
      %862 = vmatpush1.bf16.msra.mxu0 %v702
      %863 = vmatprep.mubr.bf16.mxu0 %v440
      %864 = vmatmul.mubr.bf16.gmra.mrb[0].mxu0 %v439
      %v865 = vpop.f32.mrb[0].mxu0
      %v866 = vadd.f32 %v817, %v865
      %v867 = vpop.f32.mrb[0].mxu0
      %v868 = vpop.f32.mrb[0].mxu0
      %v869 = vadd.f32 %v820, %v868
      %v870 = vpop.f32.mrb[0].mxu0
      %871 = vmatprep.mubr.bf16.mxu0 %v447
      %872 = vmatmul.mubr.bf16.gmra.mrb[0].mxu0 %v446
      %v873 = vpop.f32.mrb[0].mxu0
      %v874 = vadd.f32 %v825, %v873
      %v875 = vpop.f32.mrb[0].mxu0
      %v876 = vpop.f32.mrb[0].mxu0
      %v877 = vadd.f32 %v828, %v876
      %v878 = vpop.f32.mrb[0].mxu0
      %879 = vdwg.mxu0
      %880 = vmatprep.subr.bf16.mxu0 0
      %881 = vmatpush1.bf16.msra.mxu0 %v703
      %882 = vmatprep.subr.bf16.mxu0 0
      %883 = vmatpush1.bf16.msra.mxu0 %v704
      %884 = vmatprep.subr.bf16.mxu0 0
      %885 = vmatpush1.bf16.msra.mxu0 %v705
      %886 = vmatprep.subr.bf16.mxu0 0
      %887 = vmatpush1.bf16.msra.mxu0 %v706
      %888 = vmatprep.subr.bf16.mxu0 0
      %889 = vmatpush1.bf16.msra.mxu0 %v707
      %890 = vmatprep.subr.bf16.mxu0 0
      %891 = vmatpush1.bf16.msra.mxu0 %v708
      %892 = vmatprep.subr.bf16.mxu0 0
      %893 = vmatpush1.bf16.msra.mxu0 %v709
      %894 = vmatprep.subr.bf16.mxu0 0
      %895 = vmatpush1.bf16.msra.mxu0 %v710
      %896 = vmatprep.subr.bf16.mxu0 0
      %897 = vmatpush1.bf16.msra.mxu0 %v711
      %898 = vmatprep.subr.bf16.mxu0 0
      %899 = vmatpush1.bf16.msra.mxu0 %v712
      %900 = vmatprep.subr.bf16.mxu0 0
      %901 = vmatpush1.bf16.msra.mxu0 %v713
      %902 = vmatprep.subr.bf16.mxu0 0
      %903 = vmatpush1.bf16.msra.mxu0 %v714
      %904 = vmatprep.subr.bf16.mxu0 0
      %905 = vmatpush1.bf16.msra.mxu0 %v715
      %906 = vmatprep.subr.bf16.mxu0 0
      %907 = vmatpush1.bf16.msra.mxu0 %v716
      %908 = vmatprep.subr.bf16.mxu0 0
      %909 = vmatpush1.bf16.msra.mxu0 %v717
      %910 = vmatprep.subr.bf16.mxu0 0
      %911 = vmatpush1.bf16.msra.mxu0 %v718
      %912 = vmatprep.mubr.bf16.mxu0 %v442
      %913 = vmatmul.mubr.bf16.gmra.mrb[0].mxu0 %v441
      %v914 = vpop.f32.mrb[0].mxu0
      %v915 = vadd.f32 %v866, %v914
      %v916 = vpop.f32.mrb[0].mxu0
      %v917 = vpop.f32.mrb[0].mxu0
      %v918 = vadd.f32 %v869, %v917
      %v919 = vpop.f32.mrb[0].mxu0
      %920 = vmatprep.mubr.bf16.mxu0 %v449
      %921 = vmatmul.mubr.bf16.gmra.mrb[0].mxu0 %v448
      %v922 = vpop.f32.mrb[0].mxu0
      %v923 = vadd.f32 %v874, %v922
      %v924 = vpop.f32.mrb[0].mxu0
      %v925 = vpop.f32.mrb[0].mxu0
      %v926 = vadd.f32 %v877, %v925
      %v927 = vpop.f32.mrb[0].mxu0
      %928 = vdwg.mxu0
      %929 = vmatprep.subr.bf16.mxu0 0
      %930 = vmatpush1.bf16.msra.mxu0 %v719
      %931 = vmatprep.subr.bf16.mxu0 0
      %932 = vmatpush1.bf16.msra.mxu0 %v720
      %933 = vmatprep.subr.bf16.mxu0 0
      %934 = vmatpush1.bf16.msra.mxu0 %v721
      %935 = vmatprep.subr.bf16.mxu0 0
      %936 = vmatpush1.bf16.msra.mxu0 %v722
      %937 = vmatprep.subr.bf16.mxu0 0
      %938 = vmatpush1.bf16.msra.mxu0 0
      %939 = vmatprep.subr.bf16.mxu0 0
      %940 = vmatpush1.bf16.msra.mxu0 0
      %941 = vmatprep.subr.bf16.mxu0 0
      %942 = vmatpush1.bf16.msra.mxu0 0
      %943 = vmatprep.subr.bf16.mxu0 0
      %944 = vmatpush1.bf16.msra.mxu0 0
      %945 = vmatprep.subr.bf16.mxu0 0
      %946 = vmatpush1.bf16.msra.mxu0 0
      %947 = vmatprep.subr.bf16.mxu0 0
      %948 = vmatpush1.bf16.msra.mxu0 0
      %949 = vmatprep.subr.bf16.mxu0 0
      %950 = vmatpush1.bf16.msra.mxu0 0
      %951 = vmatprep.subr.bf16.mxu0 0
      %952 = vmatpush1.bf16.msra.mxu0 0
      %953 = vmatprep.subr.bf16.mxu0 0
      %954 = vmatpush1.bf16.msra.mxu0 0
      %955 = vmatprep.subr.bf16.mxu0 0
      %956 = vmatpush1.bf16.msra.mxu0 0
      %957 = vmatprep.subr.bf16.mxu0 0
      %958 = vmatpush1.bf16.msra.mxu0 0
      %959 = vmatprep.subr.bf16.mxu0 0
      %960 = vmatpush1.bf16.msra.mxu0 0
      %961 = vmatprep.mubr.bf16.mxu0 0
      %962 = vmatmul.mubr.bf16.gmra.mrb[0].mxu0 %v777
      %v963 = vpop.f32.mrb[0].mxu0
      %v964 = vadd.f32 %v915, %v963
      %v965 = vpop.f32.mrb[0].mxu0
      %v966 = vpop.f32.mrb[0].mxu0
      %v967 = vadd.f32 %v918, %v966
      %v968 = vpop.f32.mrb[0].mxu0
      %969 = vmatprep.mubr.bf16.mxu0 0
      %970 = vmatmul.mubr.bf16.gmra.mrb[0].mxu0 %v780
      %v971 = vpop.f32.mrb[0].mxu0
      %v972 = vadd.f32 %v923, %v971
      %v973 = vpop.f32.mrb[0].mxu0
      %v974 = vpop.f32.mrb[0].mxu0
      %v975 = vadd.f32 %v926, %v974
      %v976 = vpop.f32.mrb[0].mxu0
      %977 = vdwg.mxu0
      %v978 = vld [vmem:[%s240] sm:$0xff]
      %v979 = vld [vmem:[%s240 + $0x8] sm:$0xff]
      %v980 = vld [vmem:[%s240 + $0x10] sm:$0xff]
      %v981 = vld [vmem:[%s240 + $0x18] sm:$0xff]
      %v982 = vadd.f32 %v964, %v978
      %v983 = vadd.f32 %v967, %v979
      %v984 = vadd.f32 %v972, %v980
      %v985 = vadd.f32 %v975, %v981
      %v986 = vmax.f32 %v982, 0.0
      %v987 = vmax.f32 %v983, 0.0
      %v988 = vmax.f32 %v984, 0.0
      %v989 = vmax.f32 %v985, 0.0
      %990 = vst [vmem:[%s246] sm:$0xff] %v986
      %991 = vst [vmem:[%s246 + $0x8] sm:$0xff] %v987
      %992 = vst [vmem:[%s246 + $0x10] sm:$0xff] %v988
      %993 = vst [vmem:[%s246 + $0x18] sm:$0xff] %v989
      %s994 = smul.u32 4, %s15
      %p995 = scmp.lt.s32.totalorder %s994, 7
      %s996 = scalar_select %p995, %s994, 7
      %s997 = smul.addr %s996, 8
      %s998 = scalar_lea.vmem %s4, %s997
      // Predicated region
      $region37: #{subblock_apply.1} parent=35 // pred_check
        %p999 = pneg %p132
      $region38: #{subblock_apply.1} parent=35 // pred_check_branch
        %1001 = sbr.rel (%p999) target = $region40
      $region39: #{subblock_apply.1} parent=35 // pred_region
        %s1002 = smul.u32 4, %s15
      $region40: #{subblock_apply.1} parent=35 // pred_fallthru
        _
    $region36: #{subblock_apply.1} parent=5 // pred_fallthru
      _
    %p1003 = scmp.le.s32.totalorder 2, %s10
    // Predicated region
    $region41: #{subblock_apply.1} parent=5 // pred_check
      %p1004 = pneg %p1003
    $region42: #{subblock_apply.1} parent=5 // pred_check_branch
      %1006 = sbr.rel (%p1004) target = $region44
    $region43: #{subblock_apply.1} parent=5 // pred_region
      %s1007 = ssub.s32 %s10, 2
      // Predicated region
      $region45: #{subblock_apply.1} parent=43 // pred_check
        %p1008 = pneg %p138
      $region46: #{subblock_apply.1} parent=43 // pred_check_branch
        %1010 = sbr.rel (%p1008) target = $region48
      $region47: #{subblock_apply.1} parent=43 // pred_region
        %s1011 = smul.u32 4, %s16
        %p1012 = scmp.lt.s32.totalorder %s1011, 7
        %s1013 = scalar_select %p1012, %s1011, 7
        %s1014 = smul.addr %s1013, 8
        %s1015 = scalar_lea.vmem %s4, %s1014
      $region48: #{subblock_apply.1} parent=43 // pred_fallthru
        _
    $region44: #{subblock_apply.1} parent=5 // pred_fallthru
      _
  $region6: #{subblock_apply.1} parent=0 // loop_footer
    %s14 = sadd.s32 1, %s10
  $region7: #{subblock_apply.1} parent=0 // loop_footer_branch
    %9 = sbr.rel target = $region3
  $region8: #{subblock_apply.1} parent=0 // loop_exit
    _

</llo_original>
